<compile_context>
chip_gen: v7x
topology: tpu7x:2x2x1
jax: 0.10.0
libtpu: 0.0.40
codegen_flags: <defaults>
</compile_context>

<pallas_src>
import math

import jax
import jax.numpy as jnp
from jax.experimental import pallas as pl
from jax.experimental.pallas import tpu as pltpu

LN_EPS = 1e-5  # nn.LayerNorm default eps


def _round_up(v, mult):
    return ((v + mult - 1) // mult) * mult


def _round_down(v, mult):
    return (v // mult) * mult


def _sublane(dtype):
    # sublane tile: 8 rows for 32-bit, 16 for 16-bit, 32 for 8-bit dtypes
    return {4: 8, 2: 16, 1: 32}.get(jnp.dtype(dtype).itemsize, 8)


def _vmem_capacity_bytes():
    try:
        return int(pltpu.get_tpu_info().vmem_capacity_bytes)
    except Exception:
        return 64 << 20  # conservative fallback (v7x per-TensorCore VMEM)


def _pick_tn(dim):
    """Output-column tile for the gate matmul: multiple of 128 dividing dim, or dim."""
    if dim <= 512 or dim % 128 != 0:
        return dim
    for cand in (512, 256, 128):
        if dim % cand == 0:
            return cand
    return dim


def _layernorm_f32(x, g_ref, b_ref):
    """LayerNorm over the last dim, single fused reduction pass, f32 math."""
    inv_d = 1.0 / x.shape[-1]
    mu = jnp.sum(x, axis=-1, keepdims=True) * inv_d
    ms = jnp.sum(x * x, axis=-1, keepdims=True) * inv_d
    # E[x^2] - mu^2 can go slightly negative in f32 via cancellation -> clamp.
    var = jnp.maximum(ms - mu * mu, 0.0)
    x_hat = (x - mu) * jax.lax.rsqrt(var + LN_EPS)
    return x_hat * g_ref[...].astype(jnp.float32) + b_ref[...].astype(jnp.float32)


def _fln_kernel(x_ref, g_ref, b_ref, o_ref):
    x = x_ref[...].astype(jnp.float32)
    o_ref[...] = _layernorm_f32(x, g_ref, b_ref).astype(o_ref.dtype)


def _fln_gated_kernel(x_ref, g_ref, b_ref, w_ref, o_ref, xn_ref):
    j = pl.program_id(1)

    # LayerNorm computed once per row tile, reused for every output-column block.
    @pl.when(j == 0)
    def _():
        x = x_ref[...].astype(jnp.float32)
        xn_ref[...] = _layernorm_f32(x, g_ref, b_ref)

    tn = w_ref.shape[1]
    w = w_ref[...]
    # MXU operands in the weight's native dtype (bf16 path on v6e/v7x), f32 accumulation.
    logits = jnp.dot(xn_ref[...].astype(w.dtype), w, preferred_element_type=jnp.float32)
    # sigmoid(x) = 0.5 * (tanh(x/2) + 1): EUP tanh slot, no VPU divide, full accuracy.
    gate = 0.5 * (jnp.tanh(0.5 * logits) + 1.0)
    col0 = pl.multiple_of(j * tn, tn)
    xn_blk = xn_ref[:, pl.ds(col0, tn)]
    o_ref[...] = (xn_blk * gate).astype(o_ref.dtype)


def fast_layer_norm(x, gamma, beta, w_gate=None, *, tile_rows=512):
    """x: (..., dim); w_gate: (dim, dim) pre-transposed gate weight (in, out) or None."""
    orig_shape = x.shape
    dim = orig_shape[-1]
    x2d = x.reshape(-1, dim)
    m = x2d.shape[0]

    sub = _sublane(x.dtype)
    xi = jnp.dtype(x.dtype).itemsize
    cap = _vmem_capacity_bytes()

    g2d = gamma.reshape(1, dim)
    b2d = beta.reshape(1, dim)

    gated = w_gate is not None
    if gated:
        tn = _pick_tn(dim)
        wi = jnp.dtype(w_gate.dtype).itemsize
        # fixed: double-buffered W column block + LN params
        fixed = 2 * dim * tn * wi + 2 * dim * 4
        # per row of the row tile: x (2 buf) + out (2 buf) + f32 x_norm scratch
        # + f32 working copies (x cast, logits)
        per_row = dim * 2 * xi + tn * 2 * xi + dim * 4 + (dim * 4 + tn * 4)
    else:
        tn = dim
        fixed = 2 * dim * 4
        per_row = dim * 2 * xi + dim * 2 * xi + 2 * dim * 4

    # Generation-aware row tile: biggest tile that covers m, respects the caller's cap
    # and keeps the pipelined working set within ~70% of this chip's VMEM.
    budget = int(cap * 0.7)
    tr_cap = max(sub, (budget - fixed) // max(per_row, 1))
    tr = min(int(tile_rows), _round_up(m, sub), tr_cap)
    tr = max(sub, _round_down(tr, sub))

    grid_rows = pl.cdiv(m, tr)  # ragged m handled by Pallas partial-block masking

    if gated:
        grid = (grid_rows, dim // tn)  # tn divides dim (or tn == dim) by construction
        x_spec = pl.BlockSpec((tr, dim), lambda i, j: (i, 0))   # invariant along j
        vec_spec = pl.BlockSpec((1, dim), lambda i, j: (0, 0))  # grid-invariant params
        w_spec = pl.BlockSpec((dim, tn), lambda i, j: (0, j))
        out_spec = pl.BlockSpec((tr, tn), lambda i, j: (i, j))
        in_specs = [x_spec, vec_spec, vec_spec, w_spec]
        operands = (x2d, g2d, b2d, w_gate)
        kernel = _fln_gated_kernel
        scratch = [pltpu.VMEM((tr, dim), jnp.float32)]
        dims_sem = ("parallel", "arbitrary")
        flops = 2 * m * dim * dim + 12 * m * dim
        transcendentals = m * dim
        bytes_accessed = (2 * m * dim * xi
                          + int(grid_rows) * dim * dim * wi
                          + 2 * dim * 4)
    else:
        grid = (grid_rows,)
        x_spec = pl.BlockSpec((tr, dim), lambda i: (i, 0))
        vec_spec = pl.BlockSpec((1, dim), lambda i: (0, 0))
        out_spec = x_spec
        in_specs = [x_spec, vec_spec, vec_spec]
        operands = (x2d, g2d, b2d)
        kernel = _fln_kernel
        scratch = []
        dims_sem = ("parallel",)
        flops = 12 * m * dim
        transcendentals = m
        bytes_accessed = 2 * m * dim * xi + 2 * dim * 4

    # VMEM limit sized from the actual working set (no 64 MiB clamp, no 2x hedge),
    # capped just under this generation's physical per-core capacity.
    need = fixed + tr * per_row
    vmem_limit = int(need * 1.25) + (2 << 20)
    vmem_limit = max(vmem_limit, min(32 << 20, int(cap * 0.9)))
    vmem_limit = min(vmem_limit, int(cap * 0.9))

    out = pl.pallas_call(
        kernel,
        out_shape=jax.ShapeDtypeStruct((m, dim), x.dtype),
        grid=grid,
        in_specs=in_specs,
        out_specs=out_spec,
        scratch_shapes=scratch,
        compiler_params=pltpu.CompilerParams(
            dimension_semantics=dims_sem,
            vmem_limit_bytes=vmem_limit,
        ),
        cost_estimate=pl.CostEstimate(
            flops=int(flops),
            transcendentals=int(transcendentals),
            bytes_accessed=int(bytes_accessed),
        ),
    )(*operands)

    return out.reshape(orig_shape)


def _reference(x, gamma, beta, w_gate=None):
    x32 = x.astype(jnp.float32)
    mu = jnp.mean(x32, axis=-1, keepdims=True)
    var = jnp.mean((x32 - mu) ** 2, axis=-1, keepdims=True)
    xn = (x32 - mu) * jax.lax.rsqrt(var + LN_EPS) * gamma + beta
    if w_gate is not None:
        xn = xn * jax.nn.sigmoid(xn @ w_gate.astype(jnp.float32))
    return xn.astype(x.dtype)


if __name__ == "__main__":
    batch, seq, dim = 2, 8, 128  # lane-dense feature dim (multiple of 128)

    key = jax.random.PRNGKey(0)
    kx, kw = jax.random.split(key, 2)

    x = jax.random.normal(kx, (batch, seq, dim), dtype=jnp.float32)
    gamma = jnp.ones((dim,), jnp.float32)   # nn.LayerNorm weight init
    beta = jnp.zeros((dim,), jnp.float32)   # nn.LayerNorm bias init
    bound = 1.0 / math.sqrt(dim)            # nn.Linear(dim, dim, bias=False) init scale
    w_gate = jax.random.uniform(kw, (dim, dim), jnp.float32, -bound, bound)  # (in, out)

    # use_gating=True path (f32 weights)
    out = jax.block_until_ready(fast_layer_norm(x, gamma, beta, w_gate))
    ref = _reference(x, gamma, beta, w_gate)
    assert out.shape == x.shape
    assert jnp.allclose(out, ref, atol=1e-4, rtol=1e-4), "gated mismatch vs reference"

    # use_gating=False path
    out_ng = jax.block_until_ready(fast_layer_norm(x, gamma, beta, None))
    ref_ng = _reference(x, gamma, beta, None)
    assert jnp.allclose(out_ng, ref_ng, atol=1e-4, rtol=1e-4), "no-gate mismatch vs reference"

    # ragged row count (m not a multiple of the row tile): handled in-kernel, no host pad
    x_r = jax.random.normal(kx, (3, 5, dim), dtype=jnp.float32)
    out_r = jax.block_until_ready(fast_layer_norm(x_r, gamma, beta, w_gate, tile_rows=8))
    ref_r = _reference(x_r, gamma, beta, w_gate)
    assert jnp.allclose(out_r, ref_r, atol=1e-4, rtol=1e-4), "ragged mismatch vs reference"

    # bf16 activations + bf16 gate weights (matmul runs in bf16 with f32 accumulation,
    # while the reference matmul is f32 -> looser tolerance documents the expected gap)
    xb = x.astype(jnp.bfloat16)
    wb = w_gate.astype(jnp.bfloat16)
    out_b = jax.block_until_ready(fast_layer_norm(xb, gamma, beta, wb))
    ref_b = _reference(xb, gamma, beta, wb)
    assert jnp.allclose(out_b.astype(jnp.float32), ref_b.astype(jnp.float32),
                        atol=6e-2, rtol=6e-2), "bf16 gated mismatch vs reference"

    print("KERNEL_OK")
</pallas_src>

<mosaic_0001>
module attributes {stable_mosaic.version = 11 : i64} {
  func.func @_fln_gated_kernel(%arg0: i32, %arg1: i32, %arg2: memref<16x128xf32, #tpu.memory_space<vmem>>, %arg3: memref<1x128xf32, #tpu.memory_space<vmem>>, %arg4: memref<1x128xf32, #tpu.memory_space<vmem>>, %arg5: memref<128x128xf32, #tpu.memory_space<vmem>>, %arg6: memref<16x128xf32, #tpu.memory_space<vmem>>, %arg7: memref<16x128xf32, #tpu.memory_space<vmem>>) attributes {dimension_semantics = [#tpu.dimension_semantics<parallel>, #tpu.dimension_semantics<arbitrary>], iteration_bounds = array<i64: 1, 1>, scalar_prefetch = 0 : i64, scratch_operands = 1 : i64, tpu.core_type = #tpu.core_type<tc>, window_params = [{transform_indices = @transform_0, window_bounds = array<i64: 16, 128>}, {pipeline_mode = #tpu.pipeline_mode<synchronous>, transform_indices = @transform_1, window_bounds = array<i64: 1, 128>}, {pipeline_mode = #tpu.pipeline_mode<synchronous>, transform_indices = @transform_2, window_bounds = array<i64: 1, 128>}, {transform_indices = @transform_3, window_bounds = array<i64: 128, 128>}, {transform_indices = @transform_4, window_bounds = array<i64: 16, 128>}]} {
    %c0_i32 = arith.constant 0 : i32
    %0 = arith.cmpi eq, %arg1, %c0_i32 : i32
    %1 = arith.extui %0 : i1 to i32
    %c0_i32_0 = arith.constant 0 : i32
    %2 = arith.cmpi ne, %1, %c0_i32_0 : i32
    scf.if %2 {
      %c0_10 = arith.constant 0 : index
      %c0_11 = arith.constant 0 : index
      %19 = vector.load %arg2[%c0_10, %c0_11] : memref<16x128xf32, #tpu.memory_space<vmem>>, vector<16x128xf32>
      %cst_12 = arith.constant dense<0.000000e+00> : vector<16xf32>
      %20 = vector.multi_reduction <add>, %19, %cst_12 [1] : vector<16x128xf32> to vector<16xf32>
      %21 = vector.shape_cast %20 : vector<16xf32> to vector<16x1xf32>
      %cst_13 = arith.constant 7.812500e-03 : f32
      %22 = vector.broadcast %cst_13 : f32 to vector<16x1xf32>
      %23 = arith.mulf %21, %22 : vector<16x1xf32>
      %24 = arith.mulf %19, %19 : vector<16x128xf32>
      %cst_14 = arith.constant dense<0.000000e+00> : vector<16xf32>
      %25 = vector.multi_reduction <add>, %24, %cst_14 [1] : vector<16x128xf32> to vector<16xf32>
      %26 = vector.shape_cast %25 : vector<16xf32> to vector<16x1xf32>
      %cst_15 = arith.constant 7.812500e-03 : f32
      %27 = vector.broadcast %cst_15 : f32 to vector<16x1xf32>
      %28 = arith.mulf %26, %27 : vector<16x1xf32>
      %29 = arith.mulf %23, %23 : vector<16x1xf32>
      %30 = arith.subf %28, %29 : vector<16x1xf32>
      %cst_16 = arith.constant 0.000000e+00 : f32
      %31 = vector.broadcast %cst_16 : f32 to vector<16x1xf32>
      %32 = arith.maximumf %30, %31 : vector<16x1xf32>
      %33 = vector.broadcast %23 : vector<16x1xf32> to vector<16x128xf32>
      %34 = arith.subf %19, %33 : vector<16x128xf32>
      %cst_17 = arith.constant 9.99999974E-6 : f32
      %35 = vector.broadcast %cst_17 : f32 to vector<16x1xf32>
      %36 = arith.addf %32, %35 : vector<16x1xf32>
      %37 = math.rsqrt %36 : vector<16x1xf32>
      %38 = vector.broadcast %37 : vector<16x1xf32> to vector<16x128xf32>
      %39 = arith.mulf %34, %38 : vector<16x128xf32>
      %c0_18 = arith.constant 0 : index
      %c0_19 = arith.constant 0 : index
      %40 = vector.load %arg3[%c0_18, %c0_19] : memref<1x128xf32, #tpu.memory_space<vmem>>, vector<1x128xf32>
      %41 = vector.broadcast %40 : vector<1x128xf32> to vector<16x128xf32>
      %42 = arith.mulf %39, %41 : vector<16x128xf32>
      %c0_20 = arith.constant 0 : index
      %c0_21 = arith.constant 0 : index
      %43 = vector.load %arg4[%c0_20, %c0_21] : memref<1x128xf32, #tpu.memory_space<vmem>>, vector<1x128xf32>
      %44 = vector.broadcast %43 : vector<1x128xf32> to vector<16x128xf32>
      %45 = arith.addf %42, %44 : vector<16x128xf32>
      %c0_22 = arith.constant 0 : index
      %c0_23 = arith.constant 0 : index
      %46 = vector.load %arg7[%c0_22, %c0_23] : memref<16x128xf32, #tpu.memory_space<vmem>>, vector<16x128xf32>
      tpu.vector_store %arg7[%c0_22, %c0_23], %45 {strides = array<i32>} : memref<16x128xf32, #tpu.memory_space<vmem>>, vector<16x128xf32>,
    } else {
    }
    %c0 = arith.constant 0 : index
    %c0_1 = arith.constant 0 : index
    %3 = vector.load %arg5[%c0, %c0_1] : memref<128x128xf32, #tpu.memory_space<vmem>>, vector<128x128xf32>
    %c0_2 = arith.constant 0 : index
    %c0_3 = arith.constant 0 : index
    %4 = vector.load %arg7[%c0_2, %c0_3] : memref<16x128xf32, #tpu.memory_space<vmem>>, vector<16x128xf32>
    %cst = arith.constant dense<0.000000e+00> : vector<16x128xf32>
    %5 = tpu.matmul %4, %3, %cst {dimension_numbers = #tpu.dot_dimension_numbers<[1], [0], [0], [1], [0, 0, 1, 1], [], []>} : vector<16x128xf32>, vector<128x128xf32>, vector<16x128xf32> -> vector<16x128xf32>
    %cst_4 = arith.constant 5.000000e-01 : f32
    %6 = vector.broadcast %cst_4 : f32 to vector<16x128xf32>
    %7 = arith.mulf %6, %5 : vector<16x128xf32>
    %8 = math.tanh %7 : vector<16x128xf32>
    %cst_5 = arith.constant 1.000000e+00 : f32
    %9 = vector.broadcast %cst_5 : f32 to vector<16x128xf32>
    %10 = arith.addf %8, %9 : vector<16x128xf32>
    %cst_6 = arith.constant 5.000000e-01 : f32
    %11 = vector.broadcast %cst_6 : f32 to vector<16x128xf32>
    %12 = arith.mulf %11, %10 : vector<16x128xf32>
    %c128_i32 = arith.constant 128 : i32
    %13 = arith.muli %arg1, %c128_i32 : i32
    %14 = tpu.assume_multiple %13, 128 : i32
    %c0_7 = arith.constant 0 : index
    %15 = arith.index_cast %14 : i32 to index
    %16 = vector.load %arg7[%c0_7, %15] : memref<16x128xf32, #tpu.memory_space<vmem>>, vector<16x128xf32>
    %17 = arith.mulf %16, %12 : vector<16x128xf32>
    %c0_8 = arith.constant 0 : index
    %c0_9 = arith.constant 0 : index
    %18 = vector.load %arg6[%c0_8, %c0_9] : memref<16x128xf32, #tpu.memory_space<vmem>>, vector<16x128xf32>
    tpu.vector_store %arg6[%c0_8, %c0_9], %17 {strides = array<i32>} : memref<16x128xf32, #tpu.memory_space<vmem>>, vector<16x128xf32>,
    return
  }
  func.func @transform_0(%arg0: i32, %arg1: i32) -> (i32, i32) {
    %c0_i32 = arith.constant 0 : i32
    %c0_i32_0 = arith.constant 0 : i32
    return %arg0, %c0_i32 : i32, i32
  }
  func.func @transform_1(%arg0: i32, %arg1: i32) -> (i32, i32) {
    %c0_i32 = arith.constant 0 : i32
    %c0_i32_0 = arith.constant 0 : i32
    %c0_i32_1 = arith.constant 0 : i32
    return %c0_i32, %c0_i32_0 : i32, i32
  }
  func.func @transform_2(%arg0: i32, %arg1: i32) -> (i32, i32) {
    %c0_i32 = arith.constant 0 : i32
    %c0_i32_0 = arith.constant 0 : i32
    %c0_i32_1 = arith.constant 0 : i32
    return %c0_i32, %c0_i32_0 : i32, i32
  }
  func.func @transform_3(%arg0: i32, %arg1: i32) -> (i32, i32) {
    %c0_i32 = arith.constant 0 : i32
    %c0_i32_0 = arith.constant 0 : i32
    return %c0_i32, %arg1 : i32, i32
  }
  func.func @transform_4(%arg0: i32, %arg1: i32) -> (i32, i32) {
    %c0_i32 = arith.constant 0 : i32
    return %arg0, %arg1 : i32, i32
  }
}

</mosaic_0001>

<llo_original>
// kernel: tpu_custom_call.1
$region0: #{tpu_custom_call.1}
  #allocation0 [shape = 'u32[]', space=smem, size = 0x4, offset = 0x4, fixed_abs, tag = 'smem constant byte address 0x4 - core index']
  #allocation1 [shape = 'u32[144,128]{1,0:T(1,128)}', space=vmem, size = 0x12000, scoped, tag = 'internal scratch']
  #allocation2 [shape = 'f32[16,128]{1,0:T(8,128)}', space=vmem, size = 0x2000, scoped, tag = 'scratch operand']
  %s0 = inlined_call_operand.hbm [shape: f32[16,128], index: 0, kind: input, shape index: {}]
  %s1 = inlined_call_operand.vmem [shape: f32[1,128], index: 1, kind: input, shape index: {}]
  %s2 = inlined_call_operand.vmem [shape: f32[1,128], index: 2, kind: input, shape index: {}]
  %s3 = inlined_call_operand.hbm [shape: f32[128,128], index: 3, kind: input, shape index: {}]
  %s4 = inlined_call_operand.hbm [shape: f32[16,128], index: 4, kind: output, shape index: {}]
  %s5 = sld [smem:[#allocation0]]
  $region38: #{tpu_custom_call.1} parent=0
    _
  %s7 = ssub.s32 1, %s5
  %s8 = scalar_select 0, %s7, %s5
  $region1: #{tpu_custom_call.1} parent=0
    #allocation3 [shape = 'u8[8192]{0}', space=vmem, size = 0x2000, scoped, tag = 'input window, operand 0, single buffered']
    #allocation4 [shape = 's32[1]{0}', space=sflag, size = 0x4, scoped, tag = 'scoped memory for tpu_custom_call.1']
    #allocation5 [shape = 's32[1]{0}', space=sflag, size = 0x4, scoped, tag = 'scoped memory for tpu_custom_call.1']
    #allocation6 [shape = 'u8[65536]{0}', space=vmem, size = 0x10000, scoped, tag = 'input window, operand 3, single buffered']
    #allocation7 [shape = 's32[1]{0}', space=sflag, size = 0x4, scoped, tag = 'scoped memory for tpu_custom_call.1']
    #allocation8 [shape = 'u8[8192]{0}', space=vmem, size = 0x2000, scoped, tag = 'output window, operand 0, single buffered']
    %9 = vsyncpa [#allocation4], 0
    %10 = vsyncpa [#allocation7], 0
    %11 = vsyncpa [#allocation5], 0
    // Predicated region
    $region2: #{tpu_custom_call.1} parent=1 // pred_check
      _
    $region3: #{tpu_custom_call.1} parent=1 // pred_check_branch
      %13 = sbr.rel (0) target = $region5
    $region4: #{tpu_custom_call.1} parent=1 // pred_region
      %s15 = ssub.s32 256, 256
      %16 = vsyncadd [#allocation4], %s15
      %s17 = sshll.u32 [#allocation3], 4
      %s18 = int_to_ptr.vmem [resolvable:$true] %s17
      %23 = dma.hbm_to_vmem [thread:$0]  %s0, 256, %s18, [#allocation4], 128, 128, 8
    $region5: #{tpu_custom_call.1} parent=1 // pred_fallthru
      _
    // Predicated region
    $region6: #{tpu_custom_call.1} parent=1 // pred_check
      _
    $region7: #{tpu_custom_call.1} parent=1 // pred_check_branch
      %25 = sbr.rel (0) target = $region9
    $region8: #{tpu_custom_call.1} parent=1 // pred_region
      _
    $region9: #{tpu_custom_call.1} parent=1 // pred_fallthru
      _
    // Predicated region
    $region10: #{tpu_custom_call.1} parent=1 // pred_check
      _
    $region11: #{tpu_custom_call.1} parent=1 // pred_check_branch
      %27 = sbr.rel (0) target = $region13
    $region12: #{tpu_custom_call.1} parent=1 // pred_region
      _
    $region13: #{tpu_custom_call.1} parent=1 // pred_fallthru
      _
    // Predicated region
    $region14: #{tpu_custom_call.1} parent=1 // pred_check
      _
    $region15: #{tpu_custom_call.1} parent=1 // pred_check_branch
      %29 = sbr.rel (0) target = $region17
    $region16: #{tpu_custom_call.1} parent=1 // pred_region
      %s31 = ssub.s32 2048, 2048
      %32 = vsyncadd [#allocation7], %s31
      %s33 = sshll.u32 [#allocation6], 4
      %s34 = int_to_ptr.vmem [resolvable:$true] %s33
      %39 = dma.hbm_to_vmem [thread:$0]  %s3, 2048, %s34, [#allocation7], 128, 128, 8
    $region17: #{tpu_custom_call.1} parent=1 // pred_fallthru
      _
    // Predicated region
    $region18: #{tpu_custom_call.1} parent=1 // pred_check
      _
    $region19: #{tpu_custom_call.1} parent=1 // pred_check_branch
      %41 = sbr.rel (0) target = $region21
    $region20: #{tpu_custom_call.1} parent=1 // pred_region
      %42 = dma.done [#allocation4], 256
    $region21: #{tpu_custom_call.1} parent=1 // pred_fallthru
      _
    // Predicated region
    $region22: #{tpu_custom_call.1} parent=1 // pred_check
      _
    $region23: #{tpu_custom_call.1} parent=1 // pred_check_branch
      %44 = sbr.rel (0) target = $region25
    $region24: #{tpu_custom_call.1} parent=1 // pred_region
      %45 = dma.done [#allocation7], 2048
    $region25: #{tpu_custom_call.1} parent=1 // pred_fallthru
      _
    %p46 = scmp.eq.s32.totalorder 0, 0
    // Predicated region
    $region26: #{tpu_custom_call.1} parent=1 // pred_check
      %p47 = pneg %p46
    $region27: #{tpu_custom_call.1} parent=1 // pred_check_branch
      %49 = sbr.rel (%p47) target = $region29
    $region28: #{tpu_custom_call.1} parent=1 // pred_region
      %v50 = vld [vmem:[#allocation3] sm:$0xff]
      %v51 = vld [vmem:[#allocation3 + $0x8] sm:$0xff]
      %52 = vadd.xlane.f32.xlu0 %v50
      %v53 = vpop.xlane.xlu0 %52
      %54 = vadd.xlane.f32.xlu0 %v51
      %v55 = vpop.xlane.xlu0 %54
      %v56 = vmul.f32 %v53, 0.0078125
      %v57 = vmul.f32 %v55, 0.0078125
      %v58 = vmul.f32 %v50, %v50
      %v59 = vmul.f32 %v51, %v51
      %60 = vadd.xlane.f32.xlu0 %v58
      %v61 = vpop.xlane.xlu0 %60
      %62 = vadd.xlane.f32.xlu0 %v59
      %v63 = vpop.xlane.xlu0 %62
      %v64 = vmul.f32 %v61, 0.0078125
      %v65 = vmul.f32 %v63, 0.0078125
      %v66 = vmul.f32 %v56, %v56
      %v67 = vmul.f32 %v57, %v57
      %v68 = vsub.f32 %v64, %v66
      %v69 = vsub.f32 %v65, %v67
      %v70 = vmax.f32 %v68, 0.0
      %v71 = vmax.f32 %v69, 0.0
      %v72 = vsub.f32 %v50, %v56
      %v73 = vsub.f32 %v51, %v57
      %v74 = vadd.f32 %v70, 1e-05
      %v75 = vadd.f32 %v71, 1e-05
      %v76 = vrsqrt.pop %v74
      %v77 = vrsqrt.pop %v75
      %v78 = vmul.f32 %v72, %v76
      %v79 = vmul.f32 %v73, %v77
      %v80 = vld [vmem:[%s1] sm:$0x1]
      %v82 = vlaneseq
      %v83 = vshrl.u32 %v82, 7
      %v84 = vsub.s32 0, %v83
      %v85 = vrot.slane %v80, %v84
      %v87 = vmul.f32 %v78, %v85
      %v88 = vmul.f32 %v79, %v85
      %v89 = vld [vmem:[%s2] sm:$0x1]
      %v91 = vlaneseq
      %v92 = vshrl.u32 %v91, 7
      %v93 = vsub.s32 0, %v92
      %v94 = vrot.slane %v89, %v93
      %v96 = vadd.f32 %v87, %v94
      %v97 = vadd.f32 %v88, %v94
      %98 = vst [vmem:[#allocation2] sm:$0xff] %v96
      %99 = vst [vmem:[#allocation2 + $0x8] sm:$0xff] %v97
    $region29: #{tpu_custom_call.1} parent=1 // pred_fallthru
      _
    %v100 = vld [vmem:[#allocation6] sm:$0xff]
    %v101 = vld [vmem:[#allocation6 + $0x8] sm:$0xff]
    %v102 = vld [vmem:[#allocation6 + $0x10] sm:$0xff]
    %v103 = vld [vmem:[#allocation6 + $0x18] sm:$0xff]
    %v104 = vld [vmem:[#allocation6 + $0x20] sm:$0xff]
    %v105 = vld [vmem:[#allocation6 + $0x28] sm:$0xff]
    %v106 = vld [vmem:[#allocation6 + $0x30] sm:$0xff]
    %v107 = vld [vmem:[#allocation6 + $0x38] sm:$0xff]
    %v108 = vld [vmem:[#allocation6 + $0x40] sm:$0xff]
    %v109 = vld [vmem:[#allocation6 + $0x48] sm:$0xff]
    %v110 = vld [vmem:[#allocation6 + $0x50] sm:$0xff]
    %v111 = vld [vmem:[#allocation6 + $0x58] sm:$0xff]
    %v112 = vld [vmem:[#allocation6 + $0x60] sm:$0xff]
    %v113 = vld [vmem:[#allocation6 + $0x68] sm:$0xff]
    %v114 = vld [vmem:[#allocation6 + $0x70] sm:$0xff]
    %v115 = vld [vmem:[#allocation6 + $0x78] sm:$0xff]
    %v116 = vld [vmem:[#allocation2] sm:$0xff]
    %v117 = vld [vmem:[#allocation2 + $0x8] sm:$0xff]
    %118 = vmatprep.subr.mxu0 0.0
    %119 = vmatpush1.msra.mxu0 %v100
    %120 = vmatprep.subr.mxu0 0.0
    %121 = vmatpush1.msra.mxu0 %v101
    %122 = vmatprep.subr.mxu0 0.0
    %123 = vmatpush1.msra.mxu0 %v102
    %124 = vmatprep.subr.mxu0 0.0
    %125 = vmatpush1.msra.mxu0 %v103
    %126 = vmatprep.subr.mxu0 0.0
    %127 = vmatpush1.msra.mxu0 %v104
    %128 = vmatprep.subr.mxu0 0.0
    %129 = vmatpush1.msra.mxu0 %v105
    %130 = vmatprep.subr.mxu0 0.0
    %131 = vmatpush1.msra.mxu0 %v106
    %132 = vmatprep.subr.mxu0 0.0
    %133 = vmatpush1.msra.mxu0 %v107
    %134 = vmatprep.subr.mxu0 0.0
    %135 = vmatpush1.msra.mxu0 %v108
    %136 = vmatprep.subr.mxu0 0.0
    %137 = vmatpush1.msra.mxu0 %v109
    %138 = vmatprep.subr.mxu0 0.0
    %139 = vmatpush1.msra.mxu0 %v110
    %140 = vmatprep.subr.mxu0 0.0
    %141 = vmatpush1.msra.mxu0 %v111
    %142 = vmatprep.subr.mxu0 0.0
    %143 = vmatpush1.msra.mxu0 %v112
    %144 = vmatprep.subr.mxu0 0.0
    %145 = vmatpush1.msra.mxu0 %v113
    %146 = vmatprep.subr.mxu0 0.0
    %147 = vmatpush1.msra.mxu0 %v114
    %148 = vmatprep.subr.mxu0 0.0
    %149 = vmatpush1.msra.mxu0 %v115
    %150 = vmatprep.subr.mxu0 0.0
    %151 = vmatpush1.msra.mxu0 0.0
    %152 = vmatprep.subr.mxu0 0.0
    %153 = vmatpush1.msra.mxu0 0.0
    %154 = vmatprep.subr.mxu0 0.0
    %155 = vmatpush1.msra.mxu0 0.0
    %156 = vmatprep.subr.mxu0 0.0
    %157 = vmatpush1.msra.mxu0 0.0
    %158 = vmatprep.subr.mxu0 0.0
    %159 = vmatpush1.msra.mxu0 0.0
    %160 = vmatprep.subr.mxu0 0.0
    %161 = vmatpush1.msra.mxu0 0.0
    %162 = vmatprep.subr.mxu0 0.0
    %163 = vmatpush1.msra.mxu0 0.0
    %164 = vmatprep.subr.mxu0 0.0
    %165 = vmatpush1.msra.mxu0 0.0
    %166 = vmatprep.subr.mxu0 0.0
    %167 = vmatpush1.msra.mxu0 0.0
    %168 = vmatprep.subr.mxu0 0.0
    %169 = vmatpush1.msra.mxu0 0.0
    %170 = vmatprep.subr.mxu0 0.0
    %171 = vmatpush1.msra.mxu0 0.0
    %172 = vmatprep.subr.mxu0 0.0
    %173 = vmatpush1.msra.mxu0 0.0
    %174 = vmatprep.subr.mxu0 0.0
    %175 = vmatpush1.msra.mxu0 0.0
    %176 = vmatprep.subr.mxu0 0.0
    %177 = vmatpush1.msra.mxu0 0.0
    %178 = vmatprep.subr.mxu0 0.0
    %179 = vmatpush1.msra.mxu0 0.0
    %180 = vmatprep.subr.mxu0 0.0
    %181 = vmatpush1.msra.mxu0 0.0
    %182 = vmatprep.mubr.f32.mxu0 0.0
    %183 = vmatmul.mubr.f32.gmra.mrb[0].mxu0 %v116
    %v184 = vpop.f32.mrb[0].mxu0
    %v185 = vadd.f32 0.0, %v184
    %v186 = vpop.f32.mrb[0].mxu0
    %187 = vmatprep.mubr.f32.mxu0 0.0
    %188 = vmatmul.mubr.f32.gmra.mrb[0].mxu0 %v117
    %v189 = vpop.f32.mrb[0].mxu0
    %v190 = vadd.f32 0.0, %v189
    %v191 = vpop.f32.mrb[0].mxu0
    %192 = vdwg.mxu0
    %v193 = vmul.f32 %v185, 0.5
    %v194 = vmul.f32 %v190, 0.5
    %v195 = vtanh.pop %v193
    %v196 = vtanh.pop %v194
    %v197 = vadd.f32 %v195, 1.0
    %v198 = vadd.f32 %v196, 1.0
    %v199 = vmul.f32 %v197, 0.5
    %v200 = vmul.f32 %v198, 0.5
    %s201 = smul.u32 0, 128
    %s202 = sshra.s32 %s201, 7
    %s203 = sand.u32 %s201, 127
    %s204 = scalar_lea.vmem [#allocation2], %s202
    %v205 = vld [vmem:[%s204] sm:$0xff]
    %v206 = vld [vmem:[%s204 + $0x8] sm:$0xff]
    %v207 = vmul.f32 %v205, %v199
    %v208 = vmul.f32 %v206, %v200
    %209 = vst [vmem:[#allocation8] sm:$0xff] %v207
    %210 = vst [vmem:[#allocation8 + $0x8] sm:$0xff] %v208
    // Predicated region
    $region30: #{tpu_custom_call.1} parent=1 // pred_check
      _
    $region31: #{tpu_custom_call.1} parent=1 // pred_check_branch
      %212 = sbr.rel (0) target = $region33
    $region32: #{tpu_custom_call.1} parent=1 // pred_region
      %s214 = ssub.s32 256, 256
      %215 = vsyncadd [#allocation5], %s214
      %s216 = sshll.u32 [#allocation8], 4
      %s217 = int_to_ptr.vmem [resolvable:$true] %s216
      %222 = dma.vmem_to_hbm [thread:$0]  %s217, 256, %s4, [#allocation5], 128, 128, 8
    $region33: #{tpu_custom_call.1} parent=1 // pred_fallthru
      _
    // Predicated region
    $region34: #{tpu_custom_call.1} parent=1 // pred_check
      _
    $region35: #{tpu_custom_call.1} parent=1 // pred_check_branch
      %224 = sbr.rel (0) target = $region37
    $region36: #{tpu_custom_call.1} parent=1 // pred_region
      %225 = dma.done [#allocation5], 256
    $region37: #{tpu_custom_call.1} parent=1 // pred_fallthru
      _
    %226 = vsyncpa [#allocation4], 1
    %227 = vsyncpa [#allocation7], 1
    %228 = vsyncpa [#allocation5], 1

</llo_original>
